<compile_context>
chip_gen: v5e
topology: v5e:2x2
jax: 0.10.0
libtpu: 0.0.40
codegen_flags: <defaults>
</compile_context>

<pallas_src>
import functools

import jax
import jax.numpy as jnp
from jax import lax
from jax.experimental import pallas as pl
from jax.experimental.pallas import tpu as pltpu


# ----------------------------------------------------------------------------
# Elementwise perturbation kernel (adv-noise injection, clamp, NaN guard)
# ----------------------------------------------------------------------------
def _perturb_kernel(img_ref, adv_ref, o_ref, *, epsilon):
    # x = clamp(adv, 0, 1); x = img + eps*(2x-1); x[x!=x]=img; clamp to [0,255]
    a = jnp.clip(adv_ref[...], 0.0, 1.0)
    x = img_ref[...] + epsilon * (2.0 * a - 1.0)
    x = jnp.where(x != x, img_ref[...], x)        # NaN -> original pixel
    o_ref[...] = jnp.clip(x, 0.0, 255.0)


def perturb_pallas(img, adv, epsilon, *, lanes=512, rows_per_block=512):
    """img, adv: [N, C, H, W] float32 -> perturbed image, same shape.

    The image is flattened, zero-padded to a lane-dense (rows, 512) layout and
    processed through a 1-D row grid (512x512 f32 ~ 1 MB blocks) so this purely
    HBM-bandwidth-bound op gets double-buffered DMA/compute overlap, full-lane
    stores, and both v7x TensorCores.
    """
    shape = img.shape
    total = int(img.size)
    rows = pl.cdiv(total, lanes)
    padded = rows * lanes
    img_f = img.reshape(-1)
    adv_f = adv.reshape(-1)
    if padded != total:  # pad -> full-lane stores instead of masked partial vst
        img_f = jnp.pad(img_f, (0, padded - total))
        adv_f = jnp.pad(adv_f, (0, padded - total))
    img2 = img_f.reshape(rows, lanes)
    adv2 = adv_f.reshape(rows, lanes)
    tr = rows if rows <= rows_per_block else rows_per_block
    out = pl.pallas_call(
        functools.partial(_perturb_kernel, epsilon=float(epsilon)),
        grid=(pl.cdiv(rows, tr),),
        in_specs=[pl.BlockSpec((tr, lanes), lambda i: (i, 0)),
                  pl.BlockSpec((tr, lanes), lambda i: (i, 0))],
        out_specs=pl.BlockSpec((tr, lanes), lambda i: (i, 0)),
        out_shape=jax.ShapeDtypeStruct((rows, lanes), jnp.float32),
        compiler_params=pltpu.CompilerParams(dimension_semantics=("parallel",)),
    )(img2, adv2)
    return out.reshape(-1)[:total].reshape(shape)


# ----------------------------------------------------------------------------
# Tiled matmul (MXU, bf16 operands, f32 accumulation)
# ----------------------------------------------------------------------------
def _matmul_kernel(a_ref, b_ref, o_ref):
    o_ref[...] = jnp.dot(a_ref[...], b_ref[...],
                         preferred_element_type=jnp.float32).astype(o_ref.dtype)


def pallas_matmul(a, b, *, out_dtype=jnp.float32, tile_m=2048):
    """(M, K) @ (K, N) with an M-grid; K and N kept whole (both are small here).

    Operands are expected in bf16 (native on the MXU of v5e/v6e/v7x); the MXU
    accumulates in f32 and the result is cast to `out_dtype`.  tile_m=2048 keeps
    per-grid-step overhead small for the HBM-bound fused feature matmul while a
    2048x384 f32 output block (x2 buffers) stays well under the 32 MiB scoped
    VMEM default on every generation.  Partial last M blocks are masked by Pallas.
    """
    m, k = a.shape
    n = b.shape[1]
    tm = m if m <= tile_m else tile_m
    return pl.pallas_call(
        _matmul_kernel,
        grid=(pl.cdiv(m, tm),),
        in_specs=[pl.BlockSpec((tm, k), lambda i: (i, 0)),
                  pl.BlockSpec((k, n), lambda i: (0, 0))],
        out_specs=pl.BlockSpec((tm, n), lambda i: (i, 0)),
        out_shape=jax.ShapeDtypeStruct((m, n), out_dtype),
        compiler_params=pltpu.CompilerParams(dimension_semantics=("parallel",)),
    )(a, b)


# ----------------------------------------------------------------------------
# Depthwise cross-correlation (register-resident accumulator, row-tiled grid)
# ----------------------------------------------------------------------------
def _dw_xcorr_kernel(x_ref, z_ref, o_ref, *, hz, wz, ho_tile):
    # One batch element, one tile of `ho_tile` output rows (NHWC, C on lanes).
    # The accumulator is a loop carry (vreg-resident when small) and is written
    # to o_ref exactly once -- no per-(u,v) VMEM round-trips of the output.
    j = pl.program_id(1)
    row0 = j * ho_tile
    wo = o_ref.shape[2]

    acc = jnp.zeros(o_ref.shape, jnp.float32)
    for v in range(wz):                      # static sublane (W-axis) offsets
        def tap(u, a, _v=v):
            xs = x_ref[:, pl.ds(row0 + u, ho_tile), _v:_v + wo, :]  # (1,ht,wo,C)
            zs = z_ref[:, pl.ds(u, 1), _v:_v + 1, :]                # (1,1,1,C)
            return a + xs.astype(jnp.float32) * zs.astype(jnp.float32)
        # fori_loop(unroll=True): LLO visibility with bounded vreg live ranges.
        acc = lax.fori_loop(0, hz, tap, acc, unroll=True)
    o_ref[...] = acc.astype(o_ref.dtype)


def _pick_ho_tile(ho, wo, c, batch, acc_budget_bytes=96 * 1024):
    # Largest divisor of ho whose f32 accumulator stays within ~24 vregs, with a
    # preference for >= 2 total grid points so both v7x TensorCores get work.
    cands = [t for t in range(1, ho + 1)
             if ho % t == 0 and t * wo * c * 4 <= acc_budget_bytes]
    if not cands:
        cands = [1]
    multi = [t for t in cands if batch * (ho // t) >= 2]
    return max(multi or cands)


def dw_xcorr_pallas(x, z, out_dtype=jnp.bfloat16):
    """Per-batch, per-channel valid cross-correlation.

    x: [B, Hx, Wx, C] search features, z: [B, hz, wz, C] template features
    (bf16 in, f32 accumulation in-kernel, bf16 out).  Returns
    [B, Hx-hz+1, Wx-wz+1, C].  All 3 branches are concatenated on C so a single
    launch covers them and the lane dim (C % 128 == 0) stays dense.
    Grid = (batch, output-row tiles); x/z blocks depend only on the batch index,
    so Pallas fetches them once per batch element.
    """
    b, hx, wx, c = x.shape
    _, hz, wz, _ = z.shape
    ho, wo = hx - hz + 1, wx - wz + 1
    ho_tile = _pick_ho_tile(ho, wo, c, b)
    kernel = functools.partial(_dw_xcorr_kernel, hz=hz, wz=wz, ho_tile=ho_tile)
    return pl.pallas_call(
        kernel,
        grid=(b, ho // ho_tile),
        in_specs=[
            pl.BlockSpec((1, hx, wx, c), lambda i, j: (i, 0, 0, 0)),
            pl.BlockSpec((1, hz, wz, c), lambda i, j: (i, 0, 0, 0)),
        ],
        out_specs=pl.BlockSpec((1, ho_tile, wo, c), lambda i, j: (i, j, 0, 0)),
        out_shape=jax.ShapeDtypeStruct((b, ho, wo, c), out_dtype),
        compiler_params=pltpu.CompilerParams(
            dimension_semantics=("parallel", "parallel")),
    )(x, z)


# ----------------------------------------------------------------------------
# Synthetic tracker (backbone / neck / rpn_head) with deterministic weights.
# All linear ops are pre-composed into fused Pallas matmuls (mathematically
# exact rewrites of pool -> 1x1 convs -> xcorr -> 1x1 heads -> branch average).
# ----------------------------------------------------------------------------
class SyntheticTracker:
    POOL = 4  # stride-4 average pool in the synthetic backbone

    def __init__(self, key, feat_dim=128, num_anchor=2):
        assert feat_dim % 128 == 0, "keep feature channels lane-dense"
        self.feat_dim = feat_dim
        self.num_anchor = num_anchor
        self.head_n = 6 * num_anchor
        assert self.head_n <= 128
        ks = jax.random.split(key, 12)
        s = 0.1
        bb_w = [s * jax.random.normal(ks[i], (3, feat_dim), jnp.float32)
                for i in range(3)]
        neck_w = [s * jax.random.normal(ks[3 + i], (feat_dim, feat_dim), jnp.float32)
                  for i in range(3)]
        cls_w = [s * jax.random.normal(ks[6 + i], (feat_dim, 2 * num_anchor), jnp.float32)
                 for i in range(3)]
        loc_w = [s * jax.random.normal(ks[9 + i], (feat_dim, 4 * num_anchor), jnp.float32)
                 for i in range(3)]

        # Fused feature weight: stride-4 avg-pool + backbone 1x1 + neck 1x1, all
        # 3 branches in one (48, 3*C) matrix.  K index = cin*16 + du*4 + dv.
        p2 = self.POOL * self.POOL
        cols = []
        for i in range(3):
            wf = bb_w[i] @ neck_w[i]                        # composed 1x1 convs
            cols.append(jnp.repeat(wf, p2, axis=0) / p2)    # fold the mean pool
        self.w_feat = jnp.concatenate(cols, axis=1).astype(jnp.bfloat16)  # (48, 3C)

        # Fused head weight: per-branch cls|loc heads + /3 branch average, zero-
        # padded from N=6*na to N=128 so the head matmul output is lane-dense.
        w_head = jnp.concatenate(
            [jnp.concatenate([cls_w[i], loc_w[i]], axis=1) for i in range(3)],
            axis=0) / 3.0                                   # (3C, 6*na)
        self.w_head = jnp.pad(
            w_head, ((0, 0), (0, 128 - self.head_n))).astype(jnp.bfloat16)  # (3C, 128)

    def backbone(self, img_nchw):
        # 4x4 patch extraction (pure XLA data movement); the pool + conv compute
        # happens inside the fused Pallas matmul in neck().
        # TODO(synk): fold the patch extraction into the matmul kernel (BlockSpec
        # over image row tiles) to skip materializing the (M, 48) patch matrix.
        n, c, h, w = img_nchw.shape
        p = self.POOL
        patches = img_nchw.reshape(n, c, h // p, p, w // p, p)
        patches = jnp.transpose(patches, (0, 2, 4, 1, 3, 5))   # (n, h/4, w/4, 3, 4, 4)
        patches = patches.reshape(n * (h // p) * (w // p), c * p * p)
        return patches.astype(jnp.bfloat16), (n, h // p, w // p)

    def neck(self, feats):
        # One Pallas matmul = pool + backbone conv + neck conv for all 3 branches.
        patches, (n, h, w) = feats
        y = pallas_matmul(patches, self.w_feat, out_dtype=jnp.bfloat16)  # (M, 3C)
        y = y.reshape(n, h, w, 3 * self.feat_dim)
        c = self.feat_dim
        return [y[..., i * c:(i + 1) * c] for i in range(3)]

    def rpn_head(self, zfs, xfs):
        # Concatenate branches on channels -> one xcorr + one lane-dense head matmul.
        z_all = jnp.concatenate(zfs, axis=-1)                 # (b, hz, wz, 3C) bf16
        x_all = jnp.concatenate(xfs, axis=-1)                 # (b, hx, wx, 3C) bf16
        corr = dw_xcorr_pallas(x_all, z_all)                  # (b, ho, wo, 3C) bf16
        b, ho, wo, ctot = corr.shape
        na = self.num_anchor
        out = pallas_matmul(corr.reshape(b * ho * wo, ctot), self.w_head,
                            out_dtype=jnp.float32)            # (M, 128) lane-dense
        out = out[:, :self.head_n].reshape(b, ho, wo, self.head_n)  # drop zero pad
        cls = out[..., :2 * na]
        loc = out[..., 2 * na:]
        # TODO(synk): advanced option -- fuse xcorr + head on the MXU to skip the
        # corr intermediate; validate against this VPU path before switching.
        return jnp.transpose(cls, (0, 3, 1, 2)), jnp.transpose(loc, (0, 3, 1, 2))


# ----------------------------------------------------------------------------
# ModelAttacker
# ----------------------------------------------------------------------------
class ModelAttackerPallas:
    """JAX/Pallas port of pysot ModelAttacker (cfg.MASK.MASK=False, ADJUST=True)."""

    def __init__(self, batch, epsilon, key, z_hw=16, x_hw=32):
        self.epsilon = epsilon
        k1, k2 = jax.random.split(key)
        # nn.Parameter(torch.rand(...)) -> uniform [0, 1)
        self.adv_z = jax.random.uniform(k1, (1, 3, z_hw, z_hw), jnp.float32)
        self.adv_x = jax.random.uniform(k2, (batch, 3, x_hw, x_hw), jnp.float32)
        self.zf = None

    def perturb(self, img):
        return perturb_pallas(img, self.adv_z, self.epsilon)

    def perturb_x(self, img):
        batch = img.shape[0]
        return perturb_pallas(img, self.adv_x[:batch], self.epsilon)

    def add_noise(self, img, noise):
        return perturb_pallas(img, noise, self.epsilon)

    def template(self, z, tracker, epsilon=0.0):
        # NOTE: the reference computes self.perturb(z) when epsilon > 0 but
        # discards the result, so that dead elementwise pass is skipped here
        # (semantically identical output); the kernel is exercised in __main__.
        zf = tracker.backbone(z)
        zf = tracker.neck(zf)          # cfg.ADJUST.ADJUST == True
        self.zf = list(zf)
        return z

    def forward(self, x, tracker):
        xf = tracker.backbone(x)       # cfg.MASK.MASK == False -> no mask branch
        xf = tracker.neck(xf)          # cfg.ADJUST.ADJUST == True
        batch = xf[0].shape[0]
        if self.zf[0].shape[0] == 1:
            # equivalent to view(-1,1).repeat(1,batch).view(d,w,h,-1).permute(3,0,1,2)
            for i in range(3):
                self.zf[i] = jnp.broadcast_to(
                    self.zf[i], (batch,) + self.zf[i].shape[1:])
        elif self.zf[0].shape[0] != batch:
            for i in range(3):
                self.zf[i] = self.zf[i][:batch]
        cls, loc = tracker.rpn_head(self.zf, xf)
        return {'cls': cls, 'loc': loc}


if __name__ == "__main__":
    key = jax.random.PRNGKey(0)
    k_z, k_x, k_att, k_trk, k_mm = jax.random.split(key, 5)

    batch = 2
    # small stand-ins for the 127x127 template / 255x255 search images
    z = jax.random.uniform(k_z, (1, 3, 16, 16), jnp.float32, 0.0, 255.0)
    x = jax.random.uniform(k_x, (batch, 3, 32, 32), jnp.float32, 0.0, 255.0)

    attacker = ModelAttackerPallas(batch=batch, epsilon=0.1, key=k_att)
    tracker = SyntheticTracker(k_trk, feat_dim=128, num_anchor=2)

    # Sanity-check the tiled matmul with a non-divisible M (masked partial block).
    ka, kb = jax.random.split(k_mm)
    a_t = jax.random.normal(ka, (272, 48), jnp.float32).astype(jnp.bfloat16)
    b_t = (0.1 * jax.random.normal(kb, (48, 384), jnp.float32)).astype(jnp.bfloat16)
    got = pallas_matmul(a_t, b_t, tile_m=128)
    ref = jnp.dot(a_t.astype(jnp.float32), b_t.astype(jnp.float32))
    assert bool(jnp.allclose(got, ref, atol=1e-2, rtol=1e-2)), "tiled matmul mismatch"

    # Exercise both elementwise perturbation paths (the template-side call is
    # dead in the reference, so it is not re-run inside template()).
    pz = attacker.perturb(z)
    px = attacker.perturb_x(x)
    jax.block_until_ready(px)
    assert pz.shape == z.shape and px.shape == x.shape
    assert float(jnp.max(px)) <= 255.0 and float(jnp.min(px)) >= 0.0

    attacker.template(z, tracker)
    out = attacker.forward(x, tracker)

    jax.block_until_ready(out['cls'])
    jax.block_until_ready(out['loc'])
    assert out['cls'].shape == (batch, 4, 5, 5)
    assert out['loc'].shape == (batch, 8, 5, 5)
    print("KERNEL_OK")
</pallas_src>

<mosaic_0001>
module attributes {stable_mosaic.version = 11 : i64} {
  func.func @_matmul_kernel(%arg0: i32, %arg1: memref<128x48xbf16, #tpu.memory_space<vmem>>, %arg2: memref<48x384xbf16, #tpu.memory_space<vmem>>, %arg3: memref<128x384xf32, #tpu.memory_space<vmem>>) attributes {dimension_semantics = [#tpu.dimension_semantics<parallel>], iteration_bounds = array<i64: 3>, scalar_prefetch = 0 : i64, scratch_operands = 0 : i64, tpu.core_type = #tpu.core_type<tc>, window_params = [{transform_indices = @transform_0, window_bounds = array<i64: 128, 48>}, {pipeline_mode = #tpu.pipeline_mode<synchronous>, transform_indices = @transform_1, window_bounds = array<i64: 48, 384>}, {transform_indices = @transform_2, window_bounds = array<i64: 128, 384>}]} {
    %c0 = arith.constant 0 : index
    %c0_0 = arith.constant 0 : index
    %0 = vector.load %arg1[%c0, %c0_0] : memref<128x48xbf16, #tpu.memory_space<vmem>>, vector<128x48xbf16>
    %c0_1 = arith.constant 0 : index
    %c0_2 = arith.constant 0 : index
    %1 = vector.load %arg2[%c0_1, %c0_2] : memref<48x384xbf16, #tpu.memory_space<vmem>>, vector<48x384xbf16>
    %cst = arith.constant dense<0.000000e+00> : vector<128x384xf32>
    %2 = tpu.matmul %0, %1, %cst {dimension_numbers = #tpu.dot_dimension_numbers<[1], [0], [0], [1], [0, 0, 1, 1], [], []>} : vector<128x48xbf16>, vector<48x384xbf16>, vector<128x384xf32> -> vector<128x384xf32>
    %c0_3 = arith.constant 0 : index
    %c0_4 = arith.constant 0 : index
    %3 = vector.load %arg3[%c0_3, %c0_4] : memref<128x384xf32, #tpu.memory_space<vmem>>, vector<128x384xf32>
    tpu.vector_store %arg3[%c0_3, %c0_4], %2 {strides = array<i32>} : memref<128x384xf32, #tpu.memory_space<vmem>>, vector<128x384xf32>,
    return
  }
  func.func @transform_0(%arg0: i32) -> (i32, i32) {
    %c0_i32 = arith.constant 0 : i32
    %c0_i32_0 = arith.constant 0 : i32
    return %arg0, %c0_i32 : i32, i32
  }
  func.func @transform_1(%arg0: i32) -> (i32, i32) {
    %c0_i32 = arith.constant 0 : i32
    %c0_i32_0 = arith.constant 0 : i32
    %c0_i32_1 = arith.constant 0 : i32
    return %c0_i32, %c0_i32_0 : i32, i32
  }
  func.func @transform_2(%arg0: i32) -> (i32, i32) {
    %c0_i32 = arith.constant 0 : i32
    %c0_i32_0 = arith.constant 0 : i32
    return %arg0, %c0_i32 : i32, i32
  }
}

</mosaic_0001>

<llo_original>
// kernel: tpu_custom_call.1
$region0: #{tpu_custom_call.1}
  #allocation0 [shape = 'u32[]', space=smem, size = 0x4, offset = 0x4, fixed_abs, tag = 'smem constant byte address 0x4 - core index']
  #allocation1 [shape = 'u32[72,128]{1,0:T(1,128)}', space=vmem, size = 0x9000, scoped, tag = 'internal scratch']
  %s0 = inlined_call_operand.vmem [shape: bf16[272,48], index: 0, kind: input, shape index: {}]
  %s1 = inlined_call_operand.vmem [shape: bf16[48,384], index: 1, kind: input, shape index: {}]
  %s2 = inlined_call_operand.hbm [shape: f32[272,384], index: 2, kind: output, shape index: {}]
  %s3 = sld [smem:[#allocation0]]
  $region41: #{tpu_custom_call.1} parent=0
    _
  %s5 = ssub.s32 1, %s3
  %s6 = scalar_select 0, %s5, %s3
  $region1: #{tpu_custom_call.1} parent=0
    #allocation2 [shape = 'u8[393216]{0}', space=vmem, size = 0x60000, scoped, tag = 'output window, operand 0']
    #allocation3 [shape = 's32[2]{0}', space=sflag, size = 0x8, scoped, tag = 'scoped memory for tpu_custom_call.1']
    %7 = vsyncpa [#allocation3], 0
    %s8 = scalar_lea.sflag [#allocation3], 1
    %9 = vsyncpa %s8, 0
    loop: start=0, step=1, limit=5
    $region2: #{tpu_custom_call.1} parent=1 // loop_pre_header
      _
    $region3: #{tpu_custom_call.1} parent=1 // loop_header
      %s11 = sphi 0, %s15
      %p12 = scmp.ge.s32.totalorder %s11, 5
      %s21 = sphi 0, %s23
      %s24 = sphi 0, %s21
      %s25 = sphi 0, %s24
      %s41 = sphi 0, %s25
      %s45 = sphi 0, %s45
      %s47 = sphi 0, %s45
      %s48 = sphi 0, %s47
      %s62 = sphi 0, %s48
      %s68 = sphi 0, %s70
      %s71 = sphi 0, %s68
      %s72 = sphi 0, %s71
      %s88 = sphi 0, %s72
    $region4: #{tpu_custom_call.1} parent=1 // loop_header_branch
      %14 = sbr.rel (%p12) target = $region8
    $region5: #{tpu_custom_call.1} parent=1 // loop_body
      %s16 = ssub.s32 %s11, 1
      %s17 = ssub.s32 %s11, 2
      %s18 = sadd.s32 %s11, 1
      %s19 = ssub.s32 %s11, %s18
      %p20 = scmp.eq.s32.totalorder %s19, 0
      %s22 = sadd.s32 %s21, 1
      %s23 = scalar_select %p20, %s21, %s22
      %p26 = pneg %p20
      %p27 = scmp.eq.s32.totalorder %s11, 2
      %p28 = por %p26, %p27
      %p29 = scmp.ne.s32.totalorder %s21, %s24
      %p30 = scmp.eq.s32.totalorder %s11, 0
      %p31 = por %p29, %p30
      %p32 = scmp.ne.s32.totalorder %s21, %s24
      %p33 = scmp.eq.s32.totalorder %s16, 2
      %p34 = por %p32, %p33
      %p35 = scmp.ne.s32.totalorder %s24, %s25
      %p36 = scmp.eq.s32.totalorder %s16, 0
      %p37 = por %p35, %p36
      %p38 = scmp.ne.s32.totalorder %s24, %s25
      %p39 = scmp.eq.s32.totalorder %s17, 2
      %p40 = por %p38, %p39
      %p42 = scmp.ne.s32.totalorder %s25, %s41
      %p43 = scmp.eq.s32.totalorder %s17, 0
      %p44 = por %p42, %p43
      %s46 = sadd.s32 %s45, 1
      %p49 = scmp.eq.s32.totalorder %s11, 2
      %p50 = scmp.ne.s32.totalorder %s45, %s47
      %p51 = scmp.eq.s32.totalorder %s11, 0
      %p52 = por %p50, %p51
      %p53 = scmp.ne.s32.totalorder %s45, %s47
      %p54 = scmp.eq.s32.totalorder %s16, 2
      %p55 = por %p53, %p54
      %p56 = scmp.ne.s32.totalorder %s47, %s48
      %p57 = scmp.eq.s32.totalorder %s16, 0
      %p58 = por %p56, %p57
      %p59 = scmp.ne.s32.totalorder %s47, %s48
      %p60 = scmp.eq.s32.totalorder %s17, 2
      %p61 = por %p59, %p60
      %p63 = scmp.ne.s32.totalorder %s48, %s62
      %p64 = scmp.eq.s32.totalorder %s17, 0
      %p65 = por %p63, %p64
      %s66 = ssub.s32 %s11, %s18
      %p67 = scmp.eq.s32.totalorder %s66, 0
      %s69 = sadd.s32 %s68, 1
      %s70 = scalar_select %p67, %s68, %s69
      %p73 = pneg %p67
      %p74 = scmp.eq.s32.totalorder %s11, 2
      %p75 = por %p73, %p74
      %p76 = scmp.ne.s32.totalorder %s68, %s71
      %p77 = scmp.eq.s32.totalorder %s11, 0
      %p78 = por %p76, %p77
      %p79 = scmp.ne.s32.totalorder %s68, %s71
      %p80 = scmp.eq.s32.totalorder %s16, 2
      %p81 = por %p79, %p80
      %p82 = scmp.ne.s32.totalorder %s71, %s72
      %p83 = scmp.eq.s32.totalorder %s16, 0
      %p84 = por %p82, %p83
      %p85 = scmp.ne.s32.totalorder %s71, %s72
      %p86 = scmp.eq.s32.totalorder %s17, 2
      %p87 = por %p85, %p86
      %p89 = scmp.ne.s32.totalorder %s72, %s88
      %p90 = scmp.eq.s32.totalorder %s17, 0
      %p91 = por %p89, %p90
      %p92 = scmp.le.s32.totalorder 1, %s11
      %p93 = scmp.lt.s32.totalorder %s11, 4
      %p94 = pnand %p92, %p93
      %p95 = pneg %p94
      // Predicated region
      $region9: #{tpu_custom_call.1} parent=5 // pred_check
        _
      $region10: #{tpu_custom_call.1} parent=5 // pred_check_branch
        %97 = sbr.rel (%p94) target = $region12
      $region11: #{tpu_custom_call.1} parent=5 // pred_region
        %s98 = ssub.s32 %s11, 1
        // Predicated region
        $region13: #{tpu_custom_call.1} parent=11 // pred_check
          %p99 = pneg %p58
        $region14: #{tpu_custom_call.1} parent=11 // pred_check_branch
          %101 = sbr.rel (%p99) target = $region16
        $region15: #{tpu_custom_call.1} parent=11 // pred_region
          _
        $region16: #{tpu_custom_call.1} parent=11 // pred_fallthru
          _
      $region12: #{tpu_custom_call.1} parent=5 // pred_fallthru
        _
      %p102 = scmp.lt.s32.totalorder %s11, 3
      // Predicated region
      $region17: #{tpu_custom_call.1} parent=5 // pred_check
        %p103 = pneg %p102
      $region18: #{tpu_custom_call.1} parent=5 // pred_check_branch
        %105 = sbr.rel (%p103) target = $region20
      $region19: #{tpu_custom_call.1} parent=5 // pred_region
        // Predicated region
        $region21: #{tpu_custom_call.1} parent=19 // pred_check
          %p106 = pneg %p31
        $region22: #{tpu_custom_call.1} parent=19 // pred_check_branch
          %108 = sbr.rel (%p106) target = $region24
        $region23: #{tpu_custom_call.1} parent=19 // pred_region
          %s109 = smul.u32 16, %s11
          %s110 = ssub.s32 34, %s109
          %p111 = scmp.lt.s32.totalorder %s110, 16
          %s112 = scalar_select %p111, %s110, 16
          %s113 = smul.u32 4, %s112
          %p114 = scmp.lt.s32.totalorder %s109, 33
          %s115 = scalar_select %p114, %s109, 33
          %s116 = smul.addr %s115, 4
          %s117 = scalar_lea.vmem %s0, %s116
          %s118 = smul.u32 16, %s11
          %s119 = ssub.s32 34, %s118
          %p120 = scmp.lt.s32.totalorder %s119, 16
          %s121 = scalar_select %p120, %s119, 16
          %s122 = smul.u32 4, %s121
        $region24: #{tpu_custom_call.1} parent=19 // pred_fallthru
          _
      $region20: #{tpu_custom_call.1} parent=5 // pred_fallthru
        _
      %p123 = scmp.le.s32.totalorder 1, %s11
      %p124 = scmp.lt.s32.totalorder %s11, 4
      %p125 = pnand %p123, %p124
      %p126 = pneg %p125
      // Predicated region
      $region25: #{tpu_custom_call.1} parent=5 // pred_check
        _
      $region26: #{tpu_custom_call.1} parent=5 // pred_check_branch
        %128 = sbr.rel (%p125) target = $region28
      $region27: #{tpu_custom_call.1} parent=5 // pred_region
        %s129 = ssub.s32 %s11, 1
        %s130 = smul.u32 16, %s16
        %s131 = ssub.s32 34, %s130
        %p132 = scmp.lt.s32.totalorder %s131, 16
        %s133 = scalar_select %p132, %s131, 16
        %s134 = smul.u32 4, %s133
        %p135 = scmp.lt.s32.totalorder %s130, 33
        %s136 = scalar_select %p135, %s130, 33
        %s137 = smul.addr %s136, 4
        %s138 = scalar_lea.vmem %s0, %s137
        %p139 = pneg %p37
        %p140 = pneg %p34
        %p141 = pneg %p58
        %p142 = pneg %p55
        %p143 = pneg %p84
        %p144 = pneg %p81
        %s145 = sand.u32 %s71, 1
        %s146 = scalar_lea.sflag [#allocation3], %s145
        %s147 = sand.u32 %s71, 1
        %s148 = smul.addr %s147, 384
        %s149 = scalar_lea.vmem [#allocation2], %s148
        %s150 = smul.u32 16, %s16
        %s151 = ssub.s32 34, %s150
        %p152 = scmp.lt.s32.totalorder %s151, 16
        %s153 = scalar_select %p152, %s151, 16
        %s154 = smul.u32 4, %s153
        %p155 = scmp.lt.s32.totalorder %s150, 33
        %s156 = scalar_select %p155, %s150, 33
        %s157 = smul.addr %s156, 4
        %s158 = scalar_lea.vmem %s0, %s157
        %s159 = smul.u32 16, %s16
        %s160 = ssub.s32 34, %s159
        %p161 = scmp.lt.s32.totalorder %s160, 16
        %s162 = scalar_select %p161, %s160, 16
        %s163 = smul.u32 4, %s162
        %s164 = smul.u32 16, %s16
        %s165 = ssub.s32 34, %s164
        %p166 = scmp.lt.s32.totalorder %s165, 16
        %s167 = scalar_select %p166, %s165, 16
        %s168 = smul.u32 8, %s167
        %s169 = smul.u32 %s168, 3
        %v171 = vld [vmem:[%s158] sm:$0xf]
        %v172 = vld [vmem:[%s158 + $0x4] sm:$0xf]
        %v173 = vld [vmem:[%s158 + $0x8] sm:$0xf]
        %v174 = vld [vmem:[%s158 + $0xc] sm:$0xf]
        %v175 = vld [vmem:[%s158 + $0x10] sm:$0xf]
        %v176 = vld [vmem:[%s158 + $0x14] sm:$0xf]
        %v177 = vld [vmem:[%s158 + $0x18] sm:$0xf]
        %v178 = vld [vmem:[%s158 + $0x1c] sm:$0xf]
        %v179 = vld [vmem:[%s158 + $0x20] sm:$0xf]
        %v180 = vld [vmem:[%s158 + $0x24] sm:$0xf]
        %v181 = vld [vmem:[%s158 + $0x28] sm:$0xf]
        %v182 = vld [vmem:[%s158 + $0x2c] sm:$0xf]
        %v183 = vld [vmem:[%s158 + $0x30] sm:$0xf]
        %v184 = vld [vmem:[%s158 + $0x34] sm:$0xf]
        %v185 = vld [vmem:[%s158 + $0x38] sm:$0xf]
        %v186 = vld [vmem:[%s158 + $0x3c] sm:$0xf]
        %v187 = vld [vmem:[%s1] sm:$0xff]
        %v188 = vld [vmem:[%s1 + $0x8] sm:$0xf]
        %v189 = vld [vmem:[%s1 + $0xc] sm:$0xff]
        %v190 = vld [vmem:[%s1 + $0x14] sm:$0xf]
        %v191 = vld [vmem:[%s1 + $0x18] sm:$0xff]
        %v192 = vld [vmem:[%s1 + $0x20] sm:$0xf]
        %v193 = vld [vmem:[%s1 + $0x24] sm:$0xff]
        %v194 = vld [vmem:[%s1 + $0x2c] sm:$0xf]
        %v195 = vld [vmem:[%s1 + $0x30] sm:$0xff]
        %v196 = vld [vmem:[%s1 + $0x38] sm:$0xf]
        %v197 = vld [vmem:[%s1 + $0x3c] sm:$0xff]
        %v198 = vld [vmem:[%s1 + $0x44] sm:$0xf]
        %v215 = vunpack.c.l.b16 %v171
        %v216 = vunpack.c.l.b16 %v172
        %v217 = vunpack.c.l.b16 %v173
        %v218 = vunpack.c.l.b16 %v174
        %v219 = vunpack.c.l.b16 %v175
        %v220 = vunpack.c.l.b16 %v176
        %v221 = vunpack.c.l.b16 %v177
        %v222 = vunpack.c.l.b16 %v178
        %v223 = vunpack.c.l.b16 %v179
        %v224 = vunpack.c.l.b16 %v180
        %v225 = vunpack.c.l.b16 %v181
        %v226 = vunpack.c.l.b16 %v182
        %v227 = vunpack.c.l.b16 %v183
        %v228 = vunpack.c.l.b16 %v184
        %v229 = vunpack.c.l.b16 %v185
        %v230 = vunpack.c.l.b16 %v186
        %v231 = vpack.c.b16 %v216, %v215
        %v232 = vpack.c.b16 %v218, %v217
        %v233 = vpack.c.b16 %v220, %v219
        %v234 = vpack.c.b16 %v222, %v221
        %v235 = vpack.c.b16 %v224, %v223
        %v236 = vpack.c.b16 %v226, %v225
        %v237 = vpack.c.b16 %v228, %v227
        %v238 = vpack.c.b16 %v230, %v229
        %v251 = vunpack.c.l.b16 %v187
        %v252 = vunpack.c.h.b16 %v187
        %v253 = vunpack.c.l.b16 %v188
        %v254 = vunpack.c.l.b16 %v189
        %v255 = vunpack.c.h.b16 %v189
        %v256 = vunpack.c.l.b16 %v190
        %v257 = vunpack.c.l.b16 %v191
        %v258 = vunpack.c.h.b16 %v191
        %v259 = vunpack.c.l.b16 %v192
        %v260 = vunpack.c.l.b16 %v193
        %v261 = vunpack.c.h.b16 %v193
        %v262 = vunpack.c.l.b16 %v194
        %v263 = vunpack.c.l.b16 %v195
        %v264 = vunpack.c.h.b16 %v195
        %v265 = vunpack.c.l.b16 %v196
        %v266 = vunpack.c.l.b16 %v197
        %v267 = vunpack.c.h.b16 %v197
        %v268 = vunpack.c.l.b16 %v198
        %v269 = vpack.c.b16 %v254, %v251
        %v270 = vpack.c.b16 %v255, %v252
        %v271 = vpack.c.b16 %v256, %v253
        %v272 = vpack.c.b16 %v260, %v257
        %v273 = vpack.c.b16 %v261, %v258
        %v274 = vpack.c.b16 %v262, %v259
        %v275 = vpack.c.b16 %v266, %v263
        %v276 = vpack.c.b16 %v267, %v264
        %v277 = vpack.c.b16 %v268, %v265
        %vm287 = vcmask 392192
        %v289 = vsel %vm287, %v231, 0
        %v292 = vsel %vm287, %v232, 0
        %v295 = vsel %vm287, %v233, 0
        %v298 = vsel %vm287, %v234, 0
        %v301 = vsel %vm287, %v235, 0
        %v304 = vsel %vm287, %v236, 0
        %v307 = vsel %vm287, %v237, 0
        %v310 = vsel %vm287, %v238, 0
        %312 = vmatpush.bf16.msra.mxu0 0
        %313 = vmatpush.bf16.msra.mxu0 0
        %314 = vmatpush.bf16.msra.mxu0 0
        %315 = vmatpush.bf16.msra.mxu0 0
        %316 = vmatpush.bf16.msra.mxu0 0
        %317 = vmatpush.bf16.msra.mxu0 %v275
        %318 = vmatpush.bf16.msra.mxu0 %v272
        %319 = vmatpush.bf16.msra.mxu0 %v269
        %320 = vmatmul.bf16.gmra.mxu0 %v289
        %v321 = vpop.f32.mrf.mxu0
        %v322 = vadd.f32 0.0, %v321
        %v323 = vpop.f32.mrf.mxu0
        %v324 = vadd.f32 0.0, %v323
        %325 = vmatmul.bf16.gmra.mxu0 %v292
        %v326 = vpop.f32.mrf.mxu0
        %v327 = vadd.f32 0.0, %v326
        %v328 = vpop.f32.mrf.mxu0
        %v329 = vadd.f32 0.0, %v328
        %330 = vmatmul.bf16.gmra.mxu0 %v295
        %v331 = vpop.f32.mrf.mxu0
        %v332 = vadd.f32 0.0, %v331
        %v333 = vpop.f32.mrf.mxu0
        %v334 = vadd.f32 0.0, %v333
        %335 = vmatmul.bf16.gmra.mxu0 %v298
        %v336 = vpop.f32.mrf.mxu0
        %v337 = vadd.f32 0.0, %v336
        %v338 = vpop.f32.mrf.mxu0
        %v339 = vadd.f32 0.0, %v338
        %340 = vmatmul.bf16.gmra.mxu0 %v301
        %v341 = vpop.f32.mrf.mxu0
        %v342 = vadd.f32 0.0, %v341
        %v343 = vpop.f32.mrf.mxu0
        %v344 = vadd.f32 0.0, %v343
        %345 = vmatmul.bf16.gmra.mxu0 %v304
        %v346 = vpop.f32.mrf.mxu0
        %v347 = vadd.f32 0.0, %v346
        %v348 = vpop.f32.mrf.mxu0
        %v349 = vadd.f32 0.0, %v348
        %350 = vmatmul.bf16.gmra.mxu0 %v307
        %v351 = vpop.f32.mrf.mxu0
        %v352 = vadd.f32 0.0, %v351
        %v353 = vpop.f32.mrf.mxu0
        %v354 = vadd.f32 0.0, %v353
        %355 = vmatmul.bf16.gmra.mxu0 %v310
        %v356 = vpop.f32.mrf.mxu0
        %v357 = vadd.f32 0.0, %v356
        %v358 = vpop.f32.mrf.mxu0
        %v359 = vadd.f32 0.0, %v358
        %360 = vdwg.mxu0
        %361 = vmatpush.bf16.msra.mxu0 0
        %362 = vmatpush.bf16.msra.mxu0 0
        %363 = vmatpush.bf16.msra.mxu0 0
        %364 = vmatpush.bf16.msra.mxu0 0
        %365 = vmatpush.bf16.msra.mxu0 0
        %366 = vmatpush.bf16.msra.mxu0 %v276
        %367 = vmatpush.bf16.msra.mxu0 %v273
        %368 = vmatpush.bf16.msra.mxu0 %v270
        %369 = vmatmul.bf16.gmra.mxu0 %v289
        %v370 = vpop.f32.mrf.mxu0
        %v371 = vadd.f32 0.0, %v370
        %v372 = vpop.f32.mrf.mxu0
        %v373 = vadd.f32 0.0, %v372
        %374 = vmatmul.bf16.gmra.mxu0 %v292
        %v375 = vpop.f32.mrf.mxu0
        %v376 = vadd.f32 0.0, %v375
        %v377 = vpop.f32.mrf.mxu0
        %v378 = vadd.f32 0.0, %v377
        %379 = vmatmul.bf16.gmra.mxu0 %v295
        %v380 = vpop.f32.mrf.mxu0
        %v381 = vadd.f32 0.0, %v380
        %v382 = vpop.f32.mrf.mxu0
        %v383 = vadd.f32 0.0, %v382
        %384 = vmatmul.bf16.gmra.mxu0 %v298
        %v385 = vpop.f32.mrf.mxu0
        %v386 = vadd.f32 0.0, %v385
        %v387 = vpop.f32.mrf.mxu0
        %v388 = vadd.f32 0.0, %v387
        %389 = vmatmul.bf16.gmra.mxu0 %v301
        %v390 = vpop.f32.mrf.mxu0
        %v391 = vadd.f32 0.0, %v390
        %v392 = vpop.f32.mrf.mxu0
        %v393 = vadd.f32 0.0, %v392
        %394 = vmatmul.bf16.gmra.mxu0 %v304
        %v395 = vpop.f32.mrf.mxu0
        %v396 = vadd.f32 0.0, %v395
        %v397 = vpop.f32.mrf.mxu0
        %v398 = vadd.f32 0.0, %v397
        %399 = vmatmul.bf16.gmra.mxu0 %v307
        %v400 = vpop.f32.mrf.mxu0
        %v401 = vadd.f32 0.0, %v400
        %v402 = vpop.f32.mrf.mxu0
        %v403 = vadd.f32 0.0, %v402
        %404 = vmatmul.bf16.gmra.mxu0 %v310
        %v405 = vpop.f32.mrf.mxu0
        %v406 = vadd.f32 0.0, %v405
        %v407 = vpop.f32.mrf.mxu0
        %v408 = vadd.f32 0.0, %v407
        %409 = vdwg.mxu0
        %410 = vmatpush.bf16.msra.mxu0 0
        %411 = vmatpush.bf16.msra.mxu0 0
        %412 = vmatpush.bf16.msra.mxu0 0
        %413 = vmatpush.bf16.msra.mxu0 0
        %414 = vmatpush.bf16.msra.mxu0 0
        %415 = vmatpush.bf16.msra.mxu0 %v277
        %416 = vmatpush.bf16.msra.mxu0 %v274
        %417 = vmatpush.bf16.msra.mxu0 %v271
        %418 = vmatmul.bf16.gmra.mxu0 %v289
        %v419 = vpop.f32.mrf.mxu0
        %v420 = vadd.f32 0.0, %v419
        %v421 = vpop.f32.mrf.mxu0
        %v422 = vadd.f32 0.0, %v421
        %423 = vmatmul.bf16.gmra.mxu0 %v292
        %v424 = vpop.f32.mrf.mxu0
        %v425 = vadd.f32 0.0, %v424
        %v426 = vpop.f32.mrf.mxu0
        %v427 = vadd.f32 0.0, %v426
        %428 = vmatmul.bf16.gmra.mxu0 %v295
        %v429 = vpop.f32.mrf.mxu0
        %v430 = vadd.f32 0.0, %v429
        %v431 = vpop.f32.mrf.mxu0
        %v432 = vadd.f32 0.0, %v431
        %433 = vmatmul.bf16.gmra.mxu0 %v298
        %v434 = vpop.f32.mrf.mxu0
        %v435 = vadd.f32 0.0, %v434
        %v436 = vpop.f32.mrf.mxu0
        %v437 = vadd.f32 0.0, %v436
        %438 = vmatmul.bf16.gmra.mxu0 %v301
        %v439 = vpop.f32.mrf.mxu0
        %v440 = vadd.f32 0.0, %v439
        %v441 = vpop.f32.mrf.mxu0
        %v442 = vadd.f32 0.0, %v441
        %443 = vmatmul.bf16.gmra.mxu0 %v304
        %v444 = vpop.f32.mrf.mxu0
        %v445 = vadd.f32 0.0, %v444
        %v446 = vpop.f32.mrf.mxu0
        %v447 = vadd.f32 0.0, %v446
        %448 = vmatmul.bf16.gmra.mxu0 %v307
        %v449 = vpop.f32.mrf.mxu0
        %v450 = vadd.f32 0.0, %v449
        %v451 = vpop.f32.mrf.mxu0
        %v452 = vadd.f32 0.0, %v451
        %453 = vmatmul.bf16.gmra.mxu0 %v310
        %v454 = vpop.f32.mrf.mxu0
        %v455 = vadd.f32 0.0, %v454
        %v456 = vpop.f32.mrf.mxu0
        %v457 = vadd.f32 0.0, %v456
        %458 = vdwg.mxu0
        %459 = vst [vmem:[%s149] sm:$0xff] %v322
        %460 = vst [vmem:[%s149 + $0x8] sm:$0xff] %v371
        %461 = vst [vmem:[%s149 + $0x10] sm:$0xff] %v420
        %462 = vst [vmem:[%s149 + $0x18] sm:$0xff] %v324
        %463 = vst [vmem:[%s149 + $0x20] sm:$0xff] %v373
        %464 = vst [vmem:[%s149 + $0x28] sm:$0xff] %v422
        %465 = vst [vmem:[%s149 + $0x30] sm:$0xff] %v327
        %466 = vst [vmem:[%s149 + $0x38] sm:$0xff] %v376
        %467 = vst [vmem:[%s149 + $0x40] sm:$0xff] %v425
        %468 = vst [vmem:[%s149 + $0x48] sm:$0xff] %v329
        %469 = vst [vmem:[%s149 + $0x50] sm:$0xff] %v378
        %470 = vst [vmem:[%s149 + $0x58] sm:$0xff] %v427
        %471 = vst [vmem:[%s149 + $0x60] sm:$0xff] %v332
        %472 = vst [vmem:[%s149 + $0x68] sm:$0xff] %v381
        %473 = vst [vmem:[%s149 + $0x70] sm:$0xff] %v430
        %474 = vst [vmem:[%s149 + $0x78] sm:$0xff] %v334
        %475 = vst [vmem:[%s149 + $0x80] sm:$0xff] %v383
        %476 = vst [vmem:[%s149 + $0x88] sm:$0xff] %v432
        %477 = vst [vmem:[%s149 + $0x90] sm:$0xff] %v337
        %478 = vst [vmem:[%s149 + $0x98] sm:$0xff] %v386
        %479 = vst [vmem:[%s149 + $0xa0] sm:$0xff] %v435
        %480 = vst [vmem:[%s149 + $0xa8] sm:$0xff] %v339
        %481 = vst [vmem:[%s149 + $0xb0] sm:$0xff] %v388
        %482 = vst [vmem:[%s149 + $0xb8] sm:$0xff] %v437
        %483 = vst [vmem:[%s149 + $0xc0] sm:$0xff] %v342
        %484 = vst [vmem:[%s149 + $0xc8] sm:$0xff] %v391
        %485 = vst [vmem:[%s149 + $0xd0] sm:$0xff] %v440
        %486 = vst [vmem:[%s149 + $0xd8] sm:$0xff] %v344
        %487 = vst [vmem:[%s149 + $0xe0] sm:$0xff] %v393
        %488 = vst [vmem:[%s149 + $0xe8] sm:$0xff] %v442
        %489 = vst [vmem:[%s149 + $0xf0] sm:$0xff] %v347
        %490 = vst [vmem:[%s149 + $0xf8] sm:$0xff] %v396
        %491 = vst [vmem:[%s149 + $0x100] sm:$0xff] %v445
        %492 = vst [vmem:[%s149 + $0x108] sm:$0xff] %v349
        %493 = vst [vmem:[%s149 + $0x110] sm:$0xff] %v398
        %494 = vst [vmem:[%s149 + $0x118] sm:$0xff] %v447
        %495 = vst [vmem:[%s149 + $0x120] sm:$0xff] %v352
        %496 = vst [vmem:[%s149 + $0x128] sm:$0xff] %v401
        %497 = vst [vmem:[%s149 + $0x130] sm:$0xff] %v450
        %498 = vst [vmem:[%s149 + $0x138] sm:$0xff] %v354
        %499 = vst [vmem:[%s149 + $0x140] sm:$0xff] %v403
        %500 = vst [vmem:[%s149 + $0x148] sm:$0xff] %v452
        %501 = vst [vmem:[%s149 + $0x150] sm:$0xff] %v357
        %502 = vst [vmem:[%s149 + $0x158] sm:$0xff] %v406
        %503 = vst [vmem:[%s149 + $0x160] sm:$0xff] %v455
        %504 = vst [vmem:[%s149 + $0x168] sm:$0xff] %v359
        %505 = vst [vmem:[%s149 + $0x170] sm:$0xff] %v408
        %506 = vst [vmem:[%s149 + $0x178] sm:$0xff] %v457
        %s507 = sand.u32 %s71, 1
        %s508 = scalar_lea.sflag [#allocation3], %s507
        %s509 = sand.u32 %s71, 1
        %s510 = smul.addr %s509, 384
        %s511 = scalar_lea.vmem [#allocation2], %s510
        // Predicated region
        $region29: #{tpu_custom_call.1} parent=27 // pred_check
          %p512 = pneg %p81
        $region30: #{tpu_custom_call.1} parent=27 // pred_check_branch
          %514 = sbr.rel (%p512) target = $region32
        $region31: #{tpu_custom_call.1} parent=27 // pred_region
          %s515 = smul.u32 16, %s16
          %s516 = ssub.s32 34, %s515
          %p517 = scmp.lt.s32.totalorder %s516, 16
          %s518 = scalar_select %p517, %s516, 16
          %s519 = smul.u32 8, %s518
          %s520 = smul.u32 %s519, 3
          %s521 = ssub.s32 384, %s520
          %s522 = sshll.u32 %s521, 4
          %523 = vsyncadd %s508, %s522
          %p524 = scmp.ne.s32.totalorder 0, %s520
          %s525 = smul.addr %s515, 3
          %s526 = smul.addr %s525, 8
          %s527 = scalar_lea.hbm %s2, %s526
          %s528 = smul.u32 24, %s518
          %s529 = sshll.u32 %s511, 4
          %s530 = int_to_ptr.vmem [resolvable:$true] %s529
          %s531 = sshll.u32 %s527, 4
          %s532 = int_to_ptr.hbm [resolvable:$true] %s531
          %s533 = sshll.u32 %s528, 4
          %537 = dma.vmem_to_hbm [thread:$0]  (%p524), %s530, %s533, %s532, %s508, 384, 384, 24
        $region32: #{tpu_custom_call.1} parent=27 // pred_fallthru
          _
      $region28: #{tpu_custom_call.1} parent=5 // pred_fallthru
        _
      %p538 = scmp.le.s32.totalorder 2, %s11
      // Predicated region
      $region33: #{tpu_custom_call.1} parent=5 // pred_check
        %p539 = pneg %p538
      $region34: #{tpu_custom_call.1} parent=5 // pred_check_branch
        %541 = sbr.rel (%p539) target = $region36
      $region35: #{tpu_custom_call.1} parent=5 // pred_region
        %s542 = ssub.s32 %s11, 2
        // Predicated region
        $region37: #{tpu_custom_call.1} parent=35 // pred_check
          %p543 = pneg %p87
        $region38: #{tpu_custom_call.1} parent=35 // pred_check_branch
          %545 = sbr.rel (%p543) target = $region40
        $region39: #{tpu_custom_call.1} parent=35 // pred_region
          %s546 = sand.u32 %s72, 1
          %s547 = scalar_lea.sflag [#allocation3], %s546
          %s548 = sand.u32 %s72, 1
          %s549 = smul.addr %s548, 384
          %s550 = scalar_lea.vmem [#allocation2], %s549
          %552 = dma.done %s547, 6144
        $region40: #{tpu_custom_call.1} parent=35 // pred_fallthru
          _
      $region36: #{tpu_custom_call.1} parent=5 // pred_fallthru
        _
    $region6: #{tpu_custom_call.1} parent=1 // loop_footer
      %s15 = sadd.s32 1, %s11
    $region7: #{tpu_custom_call.1} parent=1 // loop_footer_branch
      %10 = sbr.rel target = $region3
    $region8: #{tpu_custom_call.1} parent=1 // loop_exit
      _
    %553 = vsyncpa [#allocation3], 1
    %s554 = scalar_lea.sflag [#allocation3], 1
    %555 = vsyncpa %s554, 1

</llo_original>
